<compile_context>
chip_gen: v6e
topology: v6e:2x2x1
jax: 0.10.0
libtpu: 0.0.40
codegen_flags: <defaults>
</compile_context>

<pallas_src>
import math
import jax
import jax.numpy as jnp
from jax import lax
from jax.experimental import pallas as pl
from jax.experimental.pallas import tpu as pltpu

# ---- config (mirrors __C) ----
HSIZE = 128            # __C.HSIZE
BASE = 64              # MHAtt base
HSIZE_INSIDE = HSIZE   # hsize_k=None
HHEAD = HSIZE_INSIDE // BASE
DROPOUT_R = 0.1        # identity at inference
EPS = 1e-6
RESIDUAL = True
NORM = True


def guided_att_kernel(x_ref, y_ref, wq_ref, wk_ref, wm_ref, a2_ref, b2_ref, o_ref):
    bt, lq, d = x_ref.shape
    lk = y_ref.shape[1]

    x = x_ref[...]                                       # (bt, Lq, D) f32
    # Fold batch into the matmul M dimension for the projections.
    xq = x.reshape(bt * lq, d).astype(jnp.bfloat16)      # MXU operand only
    yk = y_ref[...].reshape(bt * lk, d)                  # already bf16

    wq = wq_ref[...]                                     # (Din, D)  bf16 (PyTorch (out,in))
    wk = wk_ref[...]                                     # (Din, D)  bf16
    wm = wm_ref[...]                                     # (D, Din)  bf16

    # Q/K projections: contract the shared "in" dim directly (no transposes
    # materialized; MXU consumes the rhs-transposed form natively).
    q_proj = lax.dot_general(xq, wq, (((1,), (1,)), ((), ())),
                             preferred_element_type=jnp.float32)   # (bt*Lq, Din)
    k_proj = lax.dot_general(yk, wk, (((1,), (1,)), ((), ())),
                             preferred_element_type=jnp.float32)   # (bt*Lk, Din)

    qb = q_proj.reshape(bt, lq, HSIZE_INSIDE).astype(jnp.bfloat16)
    kb = k_proj.reshape(bt, lk, HSIZE_INSIDE).astype(jnp.bfloat16)

    scale = 1.0 / math.sqrt(BASE)
    merged = jnp.zeros((bt, lq, d), jnp.float32)
    for h in range(HHEAD):                               # HHEAD=2, unrolled at trace time
        sl = slice(h * BASE, (h + 1) * BASE)
        qh = qb[:, :, sl]                                # (bt, Lq, base)
        kh = kb[:, :, sl]                                # (bt, Lk, base)

        # scores: batched over bt, contracting the head dim (no kh.T relayout).
        s = jnp.einsum("bqc,bkc->bqk", qh, kh,
                       preferred_element_type=jnp.float32) * scale
        # y_mask is None in this configuration; softmax in f32.
        s = s - jnp.max(s, axis=-1, keepdims=True)
        p = jnp.exp(s)
        p = p * pl.reciprocal(jnp.sum(p, axis=-1, keepdims=True), approx=True)
        # TODO(synk): attention dropout is identity at inference (not applied).

        head = jnp.einsum("bqk,bkc->bqc", p.astype(jnp.bfloat16), kh,
                          preferred_element_type=jnp.float32)      # v = k (MHAtt)
        # Fold the head straight into the merge projection (skips the concat).
        merged = merged + jnp.einsum("bqc,dc->bqd", head.astype(jnp.bfloat16),
                                     wm[:, sl],
                                     preferred_element_type=jnp.float32)

    # outer dropout is identity at inference; residual uses full-precision x.
    xr = x + merged if RESIDUAL else merged

    if NORM:
        mean = jnp.mean(xr, axis=-1, keepdims=True)
        diff = xr - mean
        var = jnp.sum(diff * diff, axis=-1, keepdims=True) / (d - 1)   # torch ddof=1
        std = jnp.sqrt(var)
        out = a2_ref[...] * diff * pl.reciprocal(std + EPS, approx=True) + b2_ref[...]
    else:
        out = xr

    o_ref[...] = out.astype(o_ref.dtype)


def _pick_block_b(B, Lq):
    """Fold batches into the MXU M dimension (fewer, fatter grid steps).

    Keeps at least two parallel grid steps when B >= 4 so both v7x TensorCores
    get work; for tiny B the ~0.35us/step pipeline overhead dominates, so
    everything goes into a single step.
    """
    best = 1
    for cand in range(1, B + 1):
        if B % cand:
            continue
        if cand * Lq > 512:            # cap per-step rows (VMEM / pipeline balance)
            continue
        if B >= 4 and B // cand < 2:
            continue
        best = cand
    return best


def guided_att(x, y, wq, wk, wm, a2, b2, *, block_b=None):
    """x: (B, Lq, D) f32, y: (B, Lk, D) f32. Weights in PyTorch (out, in) layout."""
    B, Lq, D = x.shape
    _, Lk, _ = y.shape
    assert D == HSIZE and wq.shape == (HSIZE_INSIDE, HSIZE)
    assert wk.shape == (HSIZE_INSIDE, HSIZE) and wm.shape == (HSIZE, HSIZE_INSIDE)

    if block_b is None:
        block_b = _pick_block_b(B, Lq)
    assert B % block_b == 0
    grid = (B // block_b,)

    # bf16 MXU operands (f32 accumulation inside the kernel); x stays f32 so the
    # residual/LayerNorm path is full precision.  In a real model these weight
    # casts happen once at load time, not per call (no per-call transposes at all).
    y_bf = y.astype(jnp.bfloat16)
    wq_bf = wq.astype(jnp.bfloat16)
    wk_bf = wk.astype(jnp.bfloat16)
    wm_bf = wm.astype(jnp.bfloat16)
    a2_2d = a2.reshape(1, D)
    b2_2d = b2.reshape(1, D)

    return pl.pallas_call(
        guided_att_kernel,
        out_shape=jax.ShapeDtypeStruct((B, Lq, D), x.dtype),
        grid_spec=pltpu.PrefetchScalarGridSpec(
            num_scalar_prefetch=0,
            grid=grid,
            in_specs=[
                pl.BlockSpec((block_b, Lq, D), lambda b: (b, 0, 0)),
                pl.BlockSpec((block_b, Lk, D), lambda b: (b, 0, 0)),
                pl.BlockSpec((HSIZE_INSIDE, HSIZE), lambda b: (0, 0)),
                pl.BlockSpec((HSIZE_INSIDE, HSIZE), lambda b: (0, 0)),
                pl.BlockSpec((HSIZE, HSIZE_INSIDE), lambda b: (0, 0)),
                pl.BlockSpec((1, D), lambda b: (0, 0)),
                pl.BlockSpec((1, D), lambda b: (0, 0)),
            ],
            out_specs=pl.BlockSpec((block_b, Lq, D), lambda b: (b, 0, 0)),
        ),
        compiler_params=pltpu.CompilerParams(
            dimension_semantics=("parallel",)),
    )(x, y_bf, wq_bf, wk_bf, wm_bf, a2_2d, b2_2d)


def guided_att_ref(x, y, wq, wk, wm, a2, b2):
    """Pure-JAX f32 reference matching the PyTorch module."""
    B, Lq, D = x.shape
    Lk = y.shape[1]
    q = (x @ wq.T).reshape(B, Lq, HHEAD, BASE).transpose(0, 2, 1, 3)
    k = (y @ wk.T).reshape(B, Lk, HHEAD, BASE).transpose(0, 2, 1, 3)
    v = k
    scores = jnp.einsum("bhqd,bhkd->bhqk", q, k) / math.sqrt(BASE)
    p = jax.nn.softmax(scores, axis=-1)
    att = jnp.einsum("bhqk,bhkd->bhqd", p, v).transpose(0, 2, 1, 3).reshape(B, Lq, HSIZE_INSIDE)
    merged = att @ wm.T
    xr = x + merged if RESIDUAL else merged
    if NORM:
        mean = jnp.mean(xr, axis=-1, keepdims=True)
        std = jnp.std(xr, axis=-1, keepdims=True, ddof=1)
        xr = a2 * (xr - mean) / (std + EPS) + b2
    return xr


if __name__ == "__main__":
    key = jax.random.PRNGKey(0)
    kx, ky, kq, kk, km = jax.random.split(key, 5)

    B, Lq, Lk = 2, 8, 16
    x = jax.random.normal(kx, (B, Lq, HSIZE), dtype=jnp.float32)
    y = jax.random.normal(ky, (B, Lk, HSIZE), dtype=jnp.float32)

    # deterministic parameters (PyTorch (out, in) weight convention)
    wq = jax.random.normal(kq, (HSIZE_INSIDE, HSIZE), dtype=jnp.float32) * 0.05
    wk = jax.random.normal(kk, (HSIZE_INSIDE, HSIZE), dtype=jnp.float32) * 0.05
    wm = jax.random.normal(km, (HSIZE, HSIZE_INSIDE), dtype=jnp.float32) * 0.05
    a2 = jnp.ones((HSIZE,), dtype=jnp.float32)
    b2 = jnp.zeros((HSIZE,), dtype=jnp.float32)

    out = guided_att(x, y, wq, wk, wm, a2, b2)
    out = jax.block_until_ready(out)

    ref = guided_att_ref(x, y, wq, wk, wm, a2, b2)
    assert out.shape == (B, Lq, HSIZE)
    # Tolerance loosened vs. the pure-f32 version: bf16 MXU operands introduce
    # ~1e-3-level relative error before LayerNorm (f32 accumulation kept).
    assert jnp.allclose(out, ref, atol=2e-2, rtol=2e-2), "mismatch vs reference"

    print("KERNEL_OK")
</pallas_src>

<mosaic_0001>
module attributes {stable_mosaic.version = 11 : i64} {
  func.func @guided_att_kernel(%arg0: i32, %arg1: memref<2x8x128xf32, #tpu.memory_space<vmem>>, %arg2: memref<2x16x128xbf16, #tpu.memory_space<vmem>>, %arg3: memref<128x128xbf16, #tpu.memory_space<vmem>>, %arg4: memref<128x128xbf16, #tpu.memory_space<vmem>>, %arg5: memref<128x128xbf16, #tpu.memory_space<vmem>>, %arg6: memref<1x128xf32, #tpu.memory_space<vmem>>, %arg7: memref<1x128xf32, #tpu.memory_space<vmem>>, %arg8: memref<2x8x128xf32, #tpu.memory_space<vmem>>) attributes {dimension_semantics = [#tpu.dimension_semantics<parallel>], iteration_bounds = array<i64: 1>, scalar_prefetch = 0 : i64, scratch_operands = 0 : i64, tpu.core_type = #tpu.core_type<tc>, window_params = [{transform_indices = @transform_0, window_bounds = array<i64: 2, 8, 128>}, {transform_indices = @transform_1, window_bounds = array<i64: 2, 16, 128>}, {pipeline_mode = #tpu.pipeline_mode<synchronous>, transform_indices = @transform_2, window_bounds = array<i64: 128, 128>}, {pipeline_mode = #tpu.pipeline_mode<synchronous>, transform_indices = @transform_3, window_bounds = array<i64: 128, 128>}, {pipeline_mode = #tpu.pipeline_mode<synchronous>, transform_indices = @transform_4, window_bounds = array<i64: 128, 128>}, {pipeline_mode = #tpu.pipeline_mode<synchronous>, transform_indices = @transform_5, window_bounds = array<i64: 1, 128>}, {pipeline_mode = #tpu.pipeline_mode<synchronous>, transform_indices = @transform_6, window_bounds = array<i64: 1, 128>}, {transform_indices = @transform_7, window_bounds = array<i64: 2, 8, 128>}]} {
    %c0 = arith.constant 0 : index
    %c0_0 = arith.constant 0 : index
    %c0_1 = arith.constant 0 : index
    %0 = vector.load %arg1[%c0, %c0_0, %c0_1] : memref<2x8x128xf32, #tpu.memory_space<vmem>>, vector<2x8x128xf32>
    %1 = vector.shape_cast %0 : vector<2x8x128xf32> to vector<16x128xf32>
    %2 = arith.truncf %1 : vector<16x128xf32> to vector<16x128xbf16>
    %c0_2 = arith.constant 0 : index
    %c0_3 = arith.constant 0 : index
    %c0_4 = arith.constant 0 : index
    %3 = vector.load %arg2[%c0_2, %c0_3, %c0_4] : memref<2x16x128xbf16, #tpu.memory_space<vmem>>, vector<2x16x128xbf16>
    %4 = vector.shape_cast %3 : vector<2x16x128xbf16> to vector<32x128xbf16>
    %c0_5 = arith.constant 0 : index
    %c0_6 = arith.constant 0 : index
    %5 = vector.load %arg3[%c0_5, %c0_6] : memref<128x128xbf16, #tpu.memory_space<vmem>>, vector<128x128xbf16>
    %c0_7 = arith.constant 0 : index
    %c0_8 = arith.constant 0 : index
    %6 = vector.load %arg4[%c0_7, %c0_8] : memref<128x128xbf16, #tpu.memory_space<vmem>>, vector<128x128xbf16>
    %c0_9 = arith.constant 0 : index
    %c0_10 = arith.constant 0 : index
    %7 = vector.load %arg5[%c0_9, %c0_10] : memref<128x128xbf16, #tpu.memory_space<vmem>>, vector<128x128xbf16>
    %cst = arith.constant dense<0.000000e+00> : vector<16x128xf32>
    %8 = tpu.matmul %2, %5, %cst {dimension_numbers = #tpu.dot_dimension_numbers<[1], [1], [0], [0], [0, 0, 1, 0], [], []>} : vector<16x128xbf16>, vector<128x128xbf16>, vector<16x128xf32> -> vector<16x128xf32>
    %cst_11 = arith.constant dense<0.000000e+00> : vector<32x128xf32>
    %9 = tpu.matmul %4, %6, %cst_11 {dimension_numbers = #tpu.dot_dimension_numbers<[1], [1], [0], [0], [0, 0, 1, 0], [], []>} : vector<32x128xbf16>, vector<128x128xbf16>, vector<32x128xf32> -> vector<32x128xf32>
    %10 = vector.shape_cast %8 : vector<16x128xf32> to vector<2x8x128xf32>
    %11 = arith.truncf %10 : vector<2x8x128xf32> to vector<2x8x128xbf16>
    %12 = vector.shape_cast %9 : vector<32x128xf32> to vector<2x16x128xf32>
    %13 = arith.truncf %12 : vector<2x16x128xf32> to vector<2x16x128xbf16>
    %cst_12 = arith.constant 0.000000e+00 : f32
    %14 = vector.broadcast %cst_12 : f32 to vector<2x8x128xf32>
    %15 = vector.extract_strided_slice %11 {offsets = [0, 0, 0], sizes = [2, 8, 64], strides = [1, 1, 1]} : vector<2x8x128xbf16> to vector<2x8x64xbf16>
    %16 = vector.extract_strided_slice %13 {offsets = [0, 0, 0], sizes = [2, 16, 64], strides = [1, 1, 1]} : vector<2x16x128xbf16> to vector<2x16x64xbf16>
    "tpu.trace_start"() <{level = 10 : i32, message = "bqc,bkc->bqk"}> : () -> ()
    %cst_13 = arith.constant dense<0.000000e+00> : vector<2x8x16xf32>
    %17 = tpu.matmul %15, %16, %cst_13 {dimension_numbers = #tpu.dot_dimension_numbers<[2], [2], [1], [1], [0, 0, 0, 1, 1, 1], [0], [0]>} : vector<2x8x64xbf16>, vector<2x16x64xbf16>, vector<2x8x16xf32> -> vector<2x8x16xf32>
    "tpu.trace_stop"() : () -> ()
    %cst_14 = arith.constant 1.250000e-01 : f32
    %18 = vector.broadcast %cst_14 : f32 to vector<2x8x16xf32>
    %19 = arith.mulf %17, %18 : vector<2x8x16xf32>
    %cst_15 = arith.constant dense<0xFF800000> : vector<2x8xf32>
    %20 = vector.multi_reduction <maximumf>, %19, %cst_15 [2] : vector<2x8x16xf32> to vector<2x8xf32>
    %21 = vector.shape_cast %20 : vector<2x8xf32> to vector<2x8x1xf32>
    %22 = vector.broadcast %21 : vector<2x8x1xf32> to vector<2x8x16xf32>
    %23 = arith.subf %19, %22 : vector<2x8x16xf32>
    %24 = math.exp %23 : vector<2x8x16xf32>
    %cst_16 = arith.constant dense<0.000000e+00> : vector<2x8xf32>
    %25 = vector.multi_reduction <add>, %24, %cst_16 [2] : vector<2x8x16xf32> to vector<2x8xf32>
    %26 = vector.shape_cast %25 : vector<2x8xf32> to vector<2x8x1xf32>
    %27 = tpu.reciprocal %26 {approx = true} : vector<2x8x1xf32> -> vector<2x8x1xf32>
    %28 = vector.broadcast %27 : vector<2x8x1xf32> to vector<2x8x16xf32>
    %29 = arith.mulf %24, %28 : vector<2x8x16xf32>
    %30 = arith.truncf %29 : vector<2x8x16xf32> to vector<2x8x16xbf16>
    "tpu.trace_start"() <{level = 10 : i32, message = "bqk,bkc->bqc"}> : () -> ()
    %cst_17 = arith.constant dense<0.000000e+00> : vector<2x8x64xf32>
    %31 = tpu.matmul %30, %16, %cst_17 {dimension_numbers = #tpu.dot_dimension_numbers<[2], [1], [1], [2], [0, 0, 0, 1, 1, 2], [0], [0]>} : vector<2x8x16xbf16>, vector<2x16x64xbf16>, vector<2x8x64xf32> -> vector<2x8x64xf32>
    "tpu.trace_stop"() : () -> ()
    %32 = arith.truncf %31 : vector<2x8x64xf32> to vector<2x8x64xbf16>
    %33 = vector.extract_strided_slice %7 {offsets = [0, 0], sizes = [128, 64], strides = [1, 1]} : vector<128x128xbf16> to vector<128x64xbf16>
    "tpu.trace_start"() <{level = 10 : i32, message = "bqc,dc->bqd"}> : () -> ()
    %cst_18 = arith.constant dense<0.000000e+00> : vector<2x8x128xf32>
    %34 = tpu.matmul %32, %33, %cst_18 {dimension_numbers = #tpu.dot_dimension_numbers<[2], [1], [0, 1], [0], [0, 0, 0, 1, 1, 0], [], []>} : vector<2x8x64xbf16>, vector<128x64xbf16>, vector<2x8x128xf32> -> vector<2x8x128xf32>
    "tpu.trace_stop"() : () -> ()
    %35 = arith.addf %14, %34 : vector<2x8x128xf32>
    %36 = vector.extract_strided_slice %11 {offsets = [0, 0, 64], sizes = [2, 8, 64], strides = [1, 1, 1]} : vector<2x8x128xbf16> to vector<2x8x64xbf16>
    %37 = vector.extract_strided_slice %13 {offsets = [0, 0, 64], sizes = [2, 16, 64], strides = [1, 1, 1]} : vector<2x16x128xbf16> to vector<2x16x64xbf16>
    "tpu.trace_start"() <{level = 10 : i32, message = "bqc,bkc->bqk"}> : () -> ()
    %cst_19 = arith.constant dense<0.000000e+00> : vector<2x8x16xf32>
    %38 = tpu.matmul %36, %37, %cst_19 {dimension_numbers = #tpu.dot_dimension_numbers<[2], [2], [1], [1], [0, 0, 0, 1, 1, 1], [0], [0]>} : vector<2x8x64xbf16>, vector<2x16x64xbf16>, vector<2x8x16xf32> -> vector<2x8x16xf32>
    "tpu.trace_stop"() : () -> ()
    %cst_20 = arith.constant 1.250000e-01 : f32
    %39 = vector.broadcast %cst_20 : f32 to vector<2x8x16xf32>
    %40 = arith.mulf %38, %39 : vector<2x8x16xf32>
    %cst_21 = arith.constant dense<0xFF800000> : vector<2x8xf32>
    %41 = vector.multi_reduction <maximumf>, %40, %cst_21 [2] : vector<2x8x16xf32> to vector<2x8xf32>
    %42 = vector.shape_cast %41 : vector<2x8xf32> to vector<2x8x1xf32>
    %43 = vector.broadcast %42 : vector<2x8x1xf32> to vector<2x8x16xf32>
    %44 = arith.subf %40, %43 : vector<2x8x16xf32>
    %45 = math.exp %44 : vector<2x8x16xf32>
    %cst_22 = arith.constant dense<0.000000e+00> : vector<2x8xf32>
    %46 = vector.multi_reduction <add>, %45, %cst_22 [2] : vector<2x8x16xf32> to vector<2x8xf32>
    %47 = vector.shape_cast %46 : vector<2x8xf32> to vector<2x8x1xf32>
    %48 = tpu.reciprocal %47 {approx = true} : vector<2x8x1xf32> -> vector<2x8x1xf32>
    %49 = vector.broadcast %48 : vector<2x8x1xf32> to vector<2x8x16xf32>
    %50 = arith.mulf %45, %49 : vector<2x8x16xf32>
    %51 = arith.truncf %50 : vector<2x8x16xf32> to vector<2x8x16xbf16>
    "tpu.trace_start"() <{level = 10 : i32, message = "bqk,bkc->bqc"}> : () -> ()
    %cst_23 = arith.constant dense<0.000000e+00> : vector<2x8x64xf32>
    %52 = tpu.matmul %51, %37, %cst_23 {dimension_numbers = #tpu.dot_dimension_numbers<[2], [1], [1], [2], [0, 0, 0, 1, 1, 2], [0], [0]>} : vector<2x8x16xbf16>, vector<2x16x64xbf16>, vector<2x8x64xf32> -> vector<2x8x64xf32>
    "tpu.trace_stop"() : () -> ()
    %53 = arith.truncf %52 : vector<2x8x64xf32> to vector<2x8x64xbf16>
    %54 = vector.extract_strided_slice %7 {offsets = [0, 64], sizes = [128, 64], strides = [1, 1]} : vector<128x128xbf16> to vector<128x64xbf16>
    "tpu.trace_start"() <{level = 10 : i32, message = "bqc,dc->bqd"}> : () -> ()
    %cst_24 = arith.constant dense<0.000000e+00> : vector<2x8x128xf32>
    %55 = tpu.matmul %53, %54, %cst_24 {dimension_numbers = #tpu.dot_dimension_numbers<[2], [1], [0, 1], [0], [0, 0, 0, 1, 1, 0], [], []>} : vector<2x8x64xbf16>, vector<128x64xbf16>, vector<2x8x128xf32> -> vector<2x8x128xf32>
    "tpu.trace_stop"() : () -> ()
    %56 = arith.addf %35, %55 : vector<2x8x128xf32>
    %57 = arith.addf %0, %56 : vector<2x8x128xf32>
    %cst_25 = arith.constant dense<0.000000e+00> : vector<2x8xf32>
    %58 = vector.multi_reduction <add>, %57, %cst_25 [2] : vector<2x8x128xf32> to vector<2x8xf32>
    %59 = vector.shape_cast %58 : vector<2x8xf32> to vector<2x8x1xf32>
    %cst_26 = arith.constant 1.280000e+02 : f32
    %60 = vector.broadcast %cst_26 : f32 to vector<2x8x1xf32>
    %61 = arith.divf %59, %60 : vector<2x8x1xf32>
    %62 = vector.broadcast %61 : vector<2x8x1xf32> to vector<2x8x128xf32>
    %63 = arith.subf %57, %62 : vector<2x8x128xf32>
    %64 = arith.mulf %63, %63 : vector<2x8x128xf32>
    %cst_27 = arith.constant dense<0.000000e+00> : vector<2x8xf32>
    %65 = vector.multi_reduction <add>, %64, %cst_27 [2] : vector<2x8x128xf32> to vector<2x8xf32>
    %66 = vector.shape_cast %65 : vector<2x8xf32> to vector<2x8x1xf32>
    %cst_28 = arith.constant 1.270000e+02 : f32
    %67 = vector.broadcast %cst_28 : f32 to vector<2x8x1xf32>
    %68 = arith.divf %66, %67 : vector<2x8x1xf32>
    %69 = math.sqrt %68 : vector<2x8x1xf32>
    %c0_29 = arith.constant 0 : index
    %c0_30 = arith.constant 0 : index
    %70 = vector.load %arg6[%c0_29, %c0_30] : memref<1x128xf32, #tpu.memory_space<vmem>>, vector<1x128xf32>
    %71 = vector.shape_cast %70 : vector<1x128xf32> to vector<1x1x128xf32>
    %72 = vector.broadcast %71 : vector<1x1x128xf32> to vector<2x8x128xf32>
    %73 = arith.mulf %72, %63 : vector<2x8x128xf32>
    %cst_31 = arith.constant 9.99999997E-7 : f32
    %74 = vector.broadcast %cst_31 : f32 to vector<2x8x1xf32>
    %75 = arith.addf %69, %74 : vector<2x8x1xf32>
    %76 = tpu.reciprocal %75 {approx = true} : vector<2x8x1xf32> -> vector<2x8x1xf32>
    %77 = vector.broadcast %76 : vector<2x8x1xf32> to vector<2x8x128xf32>
    %78 = arith.mulf %73, %77 : vector<2x8x128xf32>
    %c0_32 = arith.constant 0 : index
    %c0_33 = arith.constant 0 : index
    %79 = vector.load %arg7[%c0_32, %c0_33] : memref<1x128xf32, #tpu.memory_space<vmem>>, vector<1x128xf32>
    %80 = vector.shape_cast %79 : vector<1x128xf32> to vector<1x1x128xf32>
    %81 = vector.broadcast %80 : vector<1x1x128xf32> to vector<2x8x128xf32>
    %82 = arith.addf %78, %81 : vector<2x8x128xf32>
    %c0_34 = arith.constant 0 : index
    %c0_35 = arith.constant 0 : index
    %c0_36 = arith.constant 0 : index
    %83 = vector.load %arg8[%c0_34, %c0_35, %c0_36] : memref<2x8x128xf32, #tpu.memory_space<vmem>>, vector<2x8x128xf32>
    tpu.vector_store %arg8[%c0_34, %c0_35, %c0_36], %82 {strides = array<i32>} : memref<2x8x128xf32, #tpu.memory_space<vmem>>, vector<2x8x128xf32>,
    return
  }
  func.func @transform_0(%arg0: i32) -> (i32, i32, i32) {
    %c0_i32 = arith.constant 0 : i32
    %c0_i32_0 = arith.constant 0 : i32
    %c0_i32_1 = arith.constant 0 : i32
    return %arg0, %c0_i32, %c0_i32_0 : i32, i32, i32
  }
  func.func @transform_1(%arg0: i32) -> (i32, i32, i32) {
    %c0_i32 = arith.constant 0 : i32
    %c0_i32_0 = arith.constant 0 : i32
    %c0_i32_1 = arith.constant 0 : i32
    return %arg0, %c0_i32, %c0_i32_0 : i32, i32, i32
  }
  func.func @transform_2(%arg0: i32) -> (i32, i32) {
    %c0_i32 = arith.constant 0 : i32
    %c0_i32_0 = arith.constant 0 : i32
    %c0_i32_1 = arith.constant 0 : i32
    return %c0_i32, %c0_i32_0 : i32, i32
  }
  func.func @transform_3(%arg0: i32) -> (i32, i32) {
    %c0_i32 = arith.constant 0 : i32
    %c0_i32_0 = arith.constant 0 : i32
    %c0_i32_1 = arith.constant 0 : i32
    return %c0_i32, %c0_i32_0 : i32, i32
  }
  func.func @transform_4(%arg0: i32) -> (i32, i32) {
    %c0_i32 = arith.constant 0 : i32
    %c0_i32_0 = arith.constant 0 : i32
    %c0_i32_1 = arith.constant 0 : i32
    return %c0_i32, %c0_i32_0 : i32, i32
  }
  func.func @transform_5(%arg0: i32) -> (i32, i32) {
    %c0_i32 = arith.constant 0 : i32
    %c0_i32_0 = arith.constant 0 : i32
    %c0_i32_1 = arith.constant 0 : i32
    return %c0_i32, %c0_i32_0 : i32, i32
  }
  func.func @transform_6(%arg0: i32) -> (i32, i32) {
    %c0_i32 = arith.constant 0 : i32
    %c0_i32_0 = arith.constant 0 : i32
    %c0_i32_1 = arith.constant 0 : i32
    return %c0_i32, %c0_i32_0 : i32, i32
  }
  func.func @transform_7(%arg0: i32) -> (i32, i32, i32) {
    %c0_i32 = arith.constant 0 : i32
    %c0_i32_0 = arith.constant 0 : i32
    %c0_i32_1 = arith.constant 0 : i32
    return %arg0, %c0_i32, %c0_i32_0 : i32, i32, i32
  }
}

</mosaic_0001>

<llo_original>
// kernel: tpu_custom_call.1
$region0: #{tpu_custom_call.1}
  #allocation0 [shape = 'u32[]', space=smem, size = 0x4, offset = 0x4, fixed_abs, tag = 'smem constant byte address 0x4 - core index']
  #allocation1 [shape = 'u32[144,128]{1,0:T(1,128)}', space=vmem, size = 0x12000, scoped, tag = 'internal scratch']
  %s0 = inlined_call_operand.hbm [shape: f32[2,8,128], index: 0, kind: input, shape index: {}]
  %s1 = inlined_call_operand.hbm [shape: bf16[2,16,128], index: 1, kind: input, shape index: {}]
  %s2 = inlined_call_operand.hbm [shape: bf16[128,128], index: 2, kind: input, shape index: {}]
  %s3 = inlined_call_operand.hbm [shape: bf16[128,128], index: 3, kind: input, shape index: {}]
  %s4 = inlined_call_operand.hbm [shape: bf16[128,128], index: 4, kind: input, shape index: {}]
  %s5 = inlined_call_operand.vmem [shape: f32[1,128], index: 5, kind: input, shape index: {}]
  %s6 = inlined_call_operand.vmem [shape: f32[1,128], index: 6, kind: input, shape index: {}]
  %s7 = inlined_call_operand.hbm [shape: f32[2,8,128], index: 7, kind: output, shape index: {}]
  %s8 = sld [smem:[#allocation0]]
  $region58: #{tpu_custom_call.1} parent=0
    _
  %s10 = ssub.s32 1, %s8
  %s11 = scalar_select 0, %s10, %s8
  $region1: #{tpu_custom_call.1} parent=0
    #allocation2 [shape = 'u8[8192]{0}', space=vmem, size = 0x2000, scoped, tag = 'input window, operand 0, single buffered']
    #allocation3 [shape = 's32[1]{0}', space=sflag, size = 0x4, scoped, tag = 'scoped memory for tpu_custom_call.1']
    #allocation4 [shape = 's32[1]{0}', space=sflag, size = 0x4, scoped, tag = 'scoped memory for tpu_custom_call.1']
    #allocation5 [shape = 'u8[8192]{0}', space=vmem, size = 0x2000, scoped, tag = 'input window, operand 1, single buffered']
    #allocation6 [shape = 's32[1]{0}', space=sflag, size = 0x4, scoped, tag = 'scoped memory for tpu_custom_call.1']
    #allocation7 [shape = 'u8[32768]{0}', space=vmem, size = 0x8000, scoped, tag = 'input window, operand 2, single buffered']
    #allocation8 [shape = 'u8[32768]{0}', space=vmem, size = 0x8000, scoped, tag = 'input window, operand 3, single buffered']
    #allocation9 [shape = 's32[1]{0}', space=sflag, size = 0x4, scoped, tag = 'scoped memory for tpu_custom_call.1']
    #allocation10 [shape = 'u8[32768]{0}', space=vmem, size = 0x8000, scoped, tag = 'input window, operand 4, single buffered']
    #allocation11 [shape = 'u8[8192]{0}', space=vmem, size = 0x2000, scoped, tag = 'output window, operand 0, single buffered']
    %12 = vsyncpa [#allocation3], 0
    %13 = vsyncpa [#allocation6], 0
    %14 = vsyncpa [#allocation9], 0
    %15 = vsyncpa [#allocation4], 0
    // Predicated region
    $region2: #{tpu_custom_call.1} parent=1 // pred_check
      _
    $region3: #{tpu_custom_call.1} parent=1 // pred_check_branch
      %17 = sbr.rel (0) target = $region5
    $region4: #{tpu_custom_call.1} parent=1 // pred_region
      %s19 = ssub.s32 256, 256
      %20 = vsyncadd [#allocation3], %s19
      %s21 = sshll.u32 [#allocation2], 4
      %s22 = int_to_ptr.vmem [resolvable:$true] %s21
      %27 = dma.hbm_to_vmem [thread:$0]  %s0, 256, %s22, [#allocation3], 128, 128, 8
    $region5: #{tpu_custom_call.1} parent=1 // pred_fallthru
      _
    // Predicated region
    $region6: #{tpu_custom_call.1} parent=1 // pred_check
      _
    $region7: #{tpu_custom_call.1} parent=1 // pred_check_branch
      %29 = sbr.rel (0) target = $region9
    $region8: #{tpu_custom_call.1} parent=1 // pred_region
      %s31 = ssub.s32 256, 256
      %32 = vsyncadd [#allocation6], %s31
      %s33 = sshll.u32 [#allocation5], 4
      %s34 = int_to_ptr.vmem [resolvable:$true] %s33
      %39 = dma.hbm_to_vmem [thread:$0]  %s1, 256, %s34, [#allocation6], 64, 64, 4
    $region9: #{tpu_custom_call.1} parent=1 // pred_fallthru
      _
    // Predicated region
    $region10: #{tpu_custom_call.1} parent=1 // pred_check
      _
    $region11: #{tpu_custom_call.1} parent=1 // pred_check_branch
      %41 = sbr.rel (0) target = $region13
    $region12: #{tpu_custom_call.1} parent=1 // pred_region
      %s43 = ssub.s32 1024, 1024
      %44 = vsyncadd [#allocation6], %s43
      %s45 = sshll.u32 [#allocation7], 4
      %s46 = int_to_ptr.vmem [resolvable:$true] %s45
      %51 = dma.hbm_to_vmem [thread:$0]  %s2, 1024, %s46, [#allocation6], 64, 64, 4
    $region13: #{tpu_custom_call.1} parent=1 // pred_fallthru
      _
    // Predicated region
    $region14: #{tpu_custom_call.1} parent=1 // pred_check
      _
    $region15: #{tpu_custom_call.1} parent=1 // pred_check_branch
      %53 = sbr.rel (0) target = $region17
    $region16: #{tpu_custom_call.1} parent=1 // pred_region
      %s55 = ssub.s32 1024, 1024
      %56 = vsyncadd [#allocation9], %s55
      %s57 = sshll.u32 [#allocation8], 4
      %s58 = int_to_ptr.vmem [resolvable:$true] %s57
      %63 = dma.hbm_to_vmem [thread:$0]  %s3, 1024, %s58, [#allocation9], 64, 64, 4
    $region17: #{tpu_custom_call.1} parent=1 // pred_fallthru
      _
    // Predicated region
    $region18: #{tpu_custom_call.1} parent=1 // pred_check
      _
    $region19: #{tpu_custom_call.1} parent=1 // pred_check_branch
      %65 = sbr.rel (0) target = $region21
    $region20: #{tpu_custom_call.1} parent=1 // pred_region
      %s67 = ssub.s32 1024, 1024
      %68 = vsyncadd [#allocation9], %s67
      %s69 = sshll.u32 [#allocation10], 4
      %s70 = int_to_ptr.vmem [resolvable:$true] %s69
      %75 = dma.hbm_to_vmem [thread:$0]  %s4, 1024, %s70, [#allocation9], 64, 64, 4
    $region21: #{tpu_custom_call.1} parent=1 // pred_fallthru
      _
    // Predicated region
    $region22: #{tpu_custom_call.1} parent=1 // pred_check
      _
    $region23: #{tpu_custom_call.1} parent=1 // pred_check_branch
      %77 = sbr.rel (0) target = $region25
    $region24: #{tpu_custom_call.1} parent=1 // pred_region
      _
    $region25: #{tpu_custom_call.1} parent=1 // pred_fallthru
      _
    // Predicated region
    $region26: #{tpu_custom_call.1} parent=1 // pred_check
      _
    $region27: #{tpu_custom_call.1} parent=1 // pred_check_branch
      %79 = sbr.rel (0) target = $region29
    $region28: #{tpu_custom_call.1} parent=1 // pred_region
      _
    $region29: #{tpu_custom_call.1} parent=1 // pred_fallthru
      _
    // Predicated region
    $region30: #{tpu_custom_call.1} parent=1 // pred_check
      _
    $region31: #{tpu_custom_call.1} parent=1 // pred_check_branch
      %81 = sbr.rel (0) target = $region33
    $region32: #{tpu_custom_call.1} parent=1 // pred_region
      %82 = dma.done [#allocation3], 256
    $region33: #{tpu_custom_call.1} parent=1 // pred_fallthru
      _
    // Predicated region
    $region34: #{tpu_custom_call.1} parent=1 // pred_check
      _
    $region35: #{tpu_custom_call.1} parent=1 // pred_check_branch
      %84 = sbr.rel (0) target = $region37
    $region36: #{tpu_custom_call.1} parent=1 // pred_region
      %85 = dma.done [#allocation6], 256
    $region37: #{tpu_custom_call.1} parent=1 // pred_fallthru
      _
    // Predicated region
    $region38: #{tpu_custom_call.1} parent=1 // pred_check
      _
    $region39: #{tpu_custom_call.1} parent=1 // pred_check_branch
      %87 = sbr.rel (0) target = $region41
    $region40: #{tpu_custom_call.1} parent=1 // pred_region
      %88 = dma.done [#allocation6], 1024
    $region41: #{tpu_custom_call.1} parent=1 // pred_fallthru
      _
    // Predicated region
    $region42: #{tpu_custom_call.1} parent=1 // pred_check
      _
    $region43: #{tpu_custom_call.1} parent=1 // pred_check_branch
      %90 = sbr.rel (0) target = $region45
    $region44: #{tpu_custom_call.1} parent=1 // pred_region
      %91 = dma.done [#allocation9], 1024
    $region45: #{tpu_custom_call.1} parent=1 // pred_fallthru
      _
    // Predicated region
    $region46: #{tpu_custom_call.1} parent=1 // pred_check
      _
    $region47: #{tpu_custom_call.1} parent=1 // pred_check_branch
      %93 = sbr.rel (0) target = $region49
    $region48: #{tpu_custom_call.1} parent=1 // pred_region
      %94 = dma.done [#allocation9], 1024
    $region49: #{tpu_custom_call.1} parent=1 // pred_fallthru
      _
    %v96 = vld [vmem:[#allocation2] sm:$0xff]
    %v97 = vld [vmem:[#allocation2 + $0x8] sm:$0xff]
    %v98 = vpack.c.bf16 %v97, %v96
    %v99 = vld [vmem:[#allocation5] sm:$0xf]
    %v100 = vld [vmem:[#allocation5 + $0x4] sm:$0xf]
    %v101 = vld [vmem:[#allocation5 + $0x8] sm:$0xf]
    %v102 = vld [vmem:[#allocation5 + $0xc] sm:$0xf]
    %v103 = vld [vmem:[#allocation7] sm:$0xf]
    %v104 = vld [vmem:[#allocation7 + $0x4] sm:$0xf]
    %v105 = vld [vmem:[#allocation7 + $0x8] sm:$0xf]
    %v106 = vld [vmem:[#allocation7 + $0xc] sm:$0xf]
    %v107 = vld [vmem:[#allocation7 + $0x10] sm:$0xf]
    %v108 = vld [vmem:[#allocation7 + $0x14] sm:$0xf]
    %v109 = vld [vmem:[#allocation7 + $0x18] sm:$0xf]
    %v110 = vld [vmem:[#allocation7 + $0x1c] sm:$0xf]
    %v111 = vld [vmem:[#allocation7 + $0x20] sm:$0xf]
    %v112 = vld [vmem:[#allocation7 + $0x24] sm:$0xf]
    %v113 = vld [vmem:[#allocation7 + $0x28] sm:$0xf]
    %v114 = vld [vmem:[#allocation7 + $0x2c] sm:$0xf]
    %v115 = vld [vmem:[#allocation7 + $0x30] sm:$0xf]
    %v116 = vld [vmem:[#allocation7 + $0x34] sm:$0xf]
    %v117 = vld [vmem:[#allocation7 + $0x38] sm:$0xf]
    %v118 = vld [vmem:[#allocation7 + $0x3c] sm:$0xf]
    %v119 = vld [vmem:[#allocation8] sm:$0xf]
    %v120 = vld [vmem:[#allocation8 + $0x4] sm:$0xf]
    %v121 = vld [vmem:[#allocation8 + $0x8] sm:$0xf]
    %v122 = vld [vmem:[#allocation8 + $0xc] sm:$0xf]
    %v123 = vld [vmem:[#allocation8 + $0x10] sm:$0xf]
    %v124 = vld [vmem:[#allocation8 + $0x14] sm:$0xf]
    %v125 = vld [vmem:[#allocation8 + $0x18] sm:$0xf]
    %v126 = vld [vmem:[#allocation8 + $0x1c] sm:$0xf]
    %v127 = vld [vmem:[#allocation8 + $0x20] sm:$0xf]
    %v128 = vld [vmem:[#allocation8 + $0x24] sm:$0xf]
    %v129 = vld [vmem:[#allocation8 + $0x28] sm:$0xf]
    %v130 = vld [vmem:[#allocation8 + $0x2c] sm:$0xf]
    %v131 = vld [vmem:[#allocation8 + $0x30] sm:$0xf]
    %v132 = vld [vmem:[#allocation8 + $0x34] sm:$0xf]
    %v133 = vld [vmem:[#allocation8 + $0x38] sm:$0xf]
    %v134 = vld [vmem:[#allocation8 + $0x3c] sm:$0xf]
    %v135 = vld [vmem:[#allocation10] sm:$0xf]
    %v136 = vld [vmem:[#allocation10 + $0x4] sm:$0xf]
    %v137 = vld [vmem:[#allocation10 + $0x8] sm:$0xf]
    %v138 = vld [vmem:[#allocation10 + $0xc] sm:$0xf]
    %v139 = vld [vmem:[#allocation10 + $0x10] sm:$0xf]
    %v140 = vld [vmem:[#allocation10 + $0x14] sm:$0xf]
    %v141 = vld [vmem:[#allocation10 + $0x18] sm:$0xf]
    %v142 = vld [vmem:[#allocation10 + $0x1c] sm:$0xf]
    %v143 = vld [vmem:[#allocation10 + $0x20] sm:$0xf]
    %v144 = vld [vmem:[#allocation10 + $0x24] sm:$0xf]
    %v145 = vld [vmem:[#allocation10 + $0x28] sm:$0xf]
    %v146 = vld [vmem:[#allocation10 + $0x2c] sm:$0xf]
    %v147 = vld [vmem:[#allocation10 + $0x30] sm:$0xf]
    %v148 = vld [vmem:[#allocation10 + $0x34] sm:$0xf]
    %v149 = vld [vmem:[#allocation10 + $0x38] sm:$0xf]
    %v150 = vld [vmem:[#allocation10 + $0x3c] sm:$0xf]
    %v167 = vunpack.c.l.b16 %v103
    %v168 = vunpack.c.l.b16 %v104
    %v169 = vunpack.c.l.b16 %v105
    %v170 = vunpack.c.l.b16 %v106
    %v171 = vunpack.c.l.b16 %v107
    %v172 = vunpack.c.l.b16 %v108
    %v173 = vunpack.c.l.b16 %v109
    %v174 = vunpack.c.l.b16 %v110
    %v175 = vunpack.c.l.b16 %v111
    %v176 = vunpack.c.l.b16 %v112
    %v177 = vunpack.c.l.b16 %v113
    %v178 = vunpack.c.l.b16 %v114
    %v179 = vunpack.c.l.b16 %v115
    %v180 = vunpack.c.l.b16 %v116
    %v181 = vunpack.c.l.b16 %v117
    %v182 = vunpack.c.l.b16 %v118
    %v183 = vpack.c.b16 %v168, %v167
    %v184 = vpack.c.b16 %v170, %v169
    %v185 = vpack.c.b16 %v172, %v171
    %v186 = vpack.c.b16 %v174, %v173
    %v187 = vpack.c.b16 %v176, %v175
    %v188 = vpack.c.b16 %v178, %v177
    %v189 = vpack.c.b16 %v180, %v179
    %v190 = vpack.c.b16 %v182, %v181
    %199 = vmatprep.subr.bf16.mxu0 0
    %200 = vmatpush1.bf16.xpose.msra.mxu0 %v190
    %201 = vmatprep.subr.bf16.mxu0 0
    %202 = vmatpush1.bf16.xpose.msra.mxu0 %v189
    %203 = vmatprep.subr.bf16.mxu0 0
    %204 = vmatpush1.bf16.xpose.msra.mxu0 %v188
    %205 = vmatprep.subr.bf16.mxu0 0
    %206 = vmatpush1.bf16.xpose.msra.mxu0 %v187
    %207 = vmatprep.subr.bf16.mxu0 0
    %208 = vmatpush1.bf16.xpose.msra.mxu0 %v186
    %209 = vmatprep.subr.bf16.mxu0 0
    %210 = vmatpush1.bf16.xpose.msra.mxu0 %v185
    %211 = vmatprep.subr.bf16.mxu0 0
    %212 = vmatpush1.bf16.xpose.msra.mxu0 %v184
    %213 = vmatprep.subr.bf16.mxu0 0
    %214 = vmatpush1.bf16.xpose.msra.mxu0 %v183
    %215 = vmatprep.subr.bf16.mxu0 0
    %216 = vmatpush2.bf16.xpose.msra.mxu0 0
    %217 = vmatprep.subr.bf16.mxu0 0
    %218 = vmatpush2.bf16.xpose.msra.mxu0 0
    %219 = vmatprep.subr.bf16.mxu0 0
    %220 = vmatpush2.bf16.xpose.msra.mxu0 0
    %221 = vmatprep.subr.bf16.mxu0 0
    %222 = vmatpush2.bf16.xpose.msra.mxu0 0
    %223 = vmatprep.subr.bf16.mxu0 0
    %224 = vmatpush2.bf16.xpose.msra.mxu0 0
    %225 = vmatprep.subr.bf16.mxu0 0
    %226 = vmatpush2.bf16.xpose.msra.mxu0 0
    %227 = vmatprep.subr.bf16.mxu0 0
    %228 = vmatpush2.bf16.xpose.msra.mxu0 0
    %229 = vmatprep.subr.bf16.mxu0 0
    %230 = vmatpush2.bf16.xpose.msra.mxu0 0
    %231 = vmatprep.mubr.bf16.mxu0 0
    %232 = vmatmul.mubr.bf16.gmra.mxu0 %v98
    %v233 = vpop.f32.mrf.mxu0
    %v234 = vadd.f32 0.0, %v233
    %v235 = vpop.f32.mrf.mxu0
    %v236 = vpop.f32.mrf.mxu0
    %v237 = vadd.f32 0.0, %v236
    %v238 = vpop.f32.mrf.mxu0
    %239 = vdwg.mxu0
    %v244 = vunpack.c.l.b16 %v99
    %v245 = vunpack.c.l.b16 %v100
    %v246 = vunpack.c.l.b16 %v101
    %v247 = vunpack.c.l.b16 %v102
    %v248 = vpack.c.b16 %v245, %v244
    %v249 = vpack.c.b16 %v247, %v246
    %v268 = vunpack.c.l.b16 %v119
    %v269 = vunpack.c.l.b16 %v120
    %v270 = vunpack.c.l.b16 %v121
    %v271 = vunpack.c.l.b16 %v122
    %v272 = vunpack.c.l.b16 %v123
    %v273 = vunpack.c.l.b16 %v124
    %v274 = vunpack.c.l.b16 %v125
    %v275 = vunpack.c.l.b16 %v126
    %v276 = vunpack.c.l.b16 %v127
    %v277 = vunpack.c.l.b16 %v128
    %v278 = vunpack.c.l.b16 %v129
    %v279 = vunpack.c.l.b16 %v130
    %v280 = vunpack.c.l.b16 %v131
    %v281 = vunpack.c.l.b16 %v132
    %v282 = vunpack.c.l.b16 %v133
    %v283 = vunpack.c.l.b16 %v134
    %v284 = vpack.c.b16 %v269, %v268
    %v285 = vpack.c.b16 %v271, %v270
    %v286 = vpack.c.b16 %v273, %v272
    %v287 = vpack.c.b16 %v275, %v274
    %v288 = vpack.c.b16 %v277, %v276
    %v289 = vpack.c.b16 %v279, %v278
    %v290 = vpack.c.b16 %v281, %v280
    %v291 = vpack.c.b16 %v283, %v282
    %300 = vmatprep.subr.bf16.mxu0 0
    %301 = vmatpush1.bf16.xpose.msra.mxu0 %v291
    %302 = vmatprep.subr.bf16.mxu0 0
    %303 = vmatpush1.bf16.xpose.msra.mxu0 %v290
    %304 = vmatprep.subr.bf16.mxu0 0
    %305 = vmatpush1.bf16.xpose.msra.mxu0 %v289
    %306 = vmatprep.subr.bf16.mxu0 0
    %307 = vmatpush1.bf16.xpose.msra.mxu0 %v288
    %308 = vmatprep.subr.bf16.mxu0 0
    %309 = vmatpush1.bf16.xpose.msra.mxu0 %v287
    %310 = vmatprep.subr.bf16.mxu0 0
    %311 = vmatpush1.bf16.xpose.msra.mxu0 %v286
    %312 = vmatprep.subr.bf16.mxu0 0
    %313 = vmatpush1.bf16.xpose.msra.mxu0 %v285
    %314 = vmatprep.subr.bf16.mxu0 0
    %315 = vmatpush1.bf16.xpose.msra.mxu0 %v284
    %316 = vmatprep.subr.bf16.mxu0 0
    %317 = vmatpush2.bf16.xpose.msra.mxu0 0
    %318 = vmatprep.subr.bf16.mxu0 0
    %319 = vmatpush2.bf16.xpose.msra.mxu0 0
    %320 = vmatprep.subr.bf16.mxu0 0
    %321 = vmatpush2.bf16.xpose.msra.mxu0 0
    %322 = vmatprep.subr.bf16.mxu0 0
    %323 = vmatpush2.bf16.xpose.msra.mxu0 0
    %324 = vmatprep.subr.bf16.mxu0 0
    %325 = vmatpush2.bf16.xpose.msra.mxu0 0
    %326 = vmatprep.subr.bf16.mxu0 0
    %327 = vmatpush2.bf16.xpose.msra.mxu0 0
    %328 = vmatprep.subr.bf16.mxu0 0
    %329 = vmatpush2.bf16.xpose.msra.mxu0 0
    %330 = vmatprep.subr.bf16.mxu0 0
    %331 = vmatpush2.bf16.xpose.msra.mxu0 0
    %332 = vmatprep.mubr.bf16.mxu0 0
    %333 = vmatmul.mubr.bf16.gmra.mxu0 %v248
    %v334 = vpop.f32.mrf.mxu0
    %v335 = vadd.f32 0.0, %v334
    %v336 = vpop.f32.mrf.mxu0
    %v337 = vpop.f32.mrf.mxu0
    %v338 = vadd.f32 0.0, %v337
    %v339 = vpop.f32.mrf.mxu0
    %340 = vmatprep.mubr.bf16.mxu0 0
    %341 = vmatmul.mubr.bf16.gmra.mxu0 %v249
    %v342 = vpop.f32.mrf.mxu0
    %v343 = vadd.f32 0.0, %v342
    %v344 = vpop.f32.mrf.mxu0
    %v345 = vpop.f32.mrf.mxu0
    %v346 = vadd.f32 0.0, %v345
    %v347 = vpop.f32.mrf.mxu0
    %348 = vdwg.mxu0
    %v349 = vpack.c.bf16 %v234, %v234
    %v350 = vpack.c.bf16 %v237, %v237
    %v351 = vpack.c.bf16 %v338, %v335
    %v352 = vpack.c.bf16 %v346, %v343
    %vm353 = vcmask 523264
    %v355 = vsel %vm353, %v349, 0
    %v358 = vsel %vm353, %v351, 0
    %360 = vmatprep.subr.bf16.mxu0 0
    %361 = vmatpush1.bf16.xpose.msra.mxu0 0
    %362 = vmatprep.subr.bf16.mxu0 0
    %363 = vmatpush1.bf16.xpose.msra.mxu0 0
    %364 = vmatprep.subr.bf16.mxu0 0
    %365 = vmatpush1.bf16.xpose.msra.mxu0 0
    %366 = vmatprep.subr.bf16.mxu0 0
    %367 = vmatpush1.bf16.xpose.msra.mxu0 0
    %368 = vmatprep.subr.bf16.mxu0 0
    %369 = vmatpush1.bf16.xpose.msra.mxu0 0
    %370 = vmatprep.subr.bf16.mxu0 0
    %371 = vmatpush1.bf16.xpose.msra.mxu0 0
    %372 = vmatprep.subr.bf16.mxu0 0
    %373 = vmatpush1.bf16.xpose.msra.mxu0 0
    %374 = vmatprep.subr.bf16.mxu0 0
    %375 = vmatpush1.bf16.xpose.msra.mxu0 %v358
    %376 = vmatprep.subr.bf16.mxu0 0
    %377 = vmatpush2.bf16.xpose.msra.mxu0 0
    %378 = vmatprep.subr.bf16.mxu0 0
    %379 = vmatpush2.bf16.xpose.msra.mxu0 0
    %380 = vmatprep.subr.bf16.mxu0 0
    %381 = vmatpush2.bf16.xpose.msra.mxu0 0
    %382 = vmatprep.subr.bf16.mxu0 0
    %383 = vmatpush2.bf16.xpose.msra.mxu0 0
    %384 = vmatprep.subr.bf16.mxu0 0
    %385 = vmatpush2.bf16.xpose.msra.mxu0 0
    %386 = vmatprep.subr.bf16.mxu0 0
    %387 = vmatpush2.bf16.xpose.msra.mxu0 0
    %388 = vmatprep.subr.bf16.mxu0 0
    %389 = vmatpush2.bf16.xpose.msra.mxu0 0
    %390 = vmatprep.subr.bf16.mxu0 0
    %391 = vmatpush2.bf16.xpose.msra.mxu0 0
    %392 = vmatprep.mubr.bf16.mxu0 0
    %393 = vmatmul.mubr.bf16.gmra.mxu0 %v355
    %v394 = vpop.f32.mrf.mxu0
    %v395 = vadd.f32 0.0, %v394
    %v396 = vpop.f32.mrf.mxu0
    %v397 = vpop.f32.mrf.mxu0
    %v398 = vpop.f32.mrf.mxu0
    %399 = vdwg.mxu0
    %v401 = vsel %vm353, %v350, 0
    %v404 = vsel %vm353, %v352, 0
    %406 = vmatprep.subr.bf16.mxu0 0
    %407 = vmatpush1.bf16.xpose.msra.mxu0 0
    %408 = vmatprep.subr.bf16.mxu0 0
    %409 = vmatpush1.bf16.xpose.msra.mxu0 0
    %410 = vmatprep.subr.bf16.mxu0 0
    %411 = vmatpush1.bf16.xpose.msra.mxu0 0
    %412 = vmatprep.subr.bf16.mxu0 0
    %413 = vmatpush1.bf16.xpose.msra.mxu0 0
    %414 = vmatprep.subr.bf16.mxu0 0
    %415 = vmatpush1.bf16.xpose.msra.mxu0 0
    %416 = vmatprep.subr.bf16.mxu0 0
    %417 = vmatpush1.bf16.xpose.msra.mxu0 0
    %418 = vmatprep.subr.bf16.mxu0 0
    %419 = vmatpush1.bf16.xpose.msra.mxu0 0
    %420 = vmatprep.subr.bf16.mxu0 0
    %421 = vmatpush1.bf16.xpose.msra.mxu0 %v404
    %422 = vmatprep.subr.bf16.mxu0 0
    %423 = vmatpush2.bf16.xpose.msra.mxu0 0
    %424 = vmatprep.subr.bf16.mxu0 0
    %425 = vmatpush2.bf16.xpose.msra.mxu0 0
    %426 = vmatprep.subr.bf16.mxu0 0
    %427 = vmatpush2.bf16.xpose.msra.mxu0 0
    %428 = vmatprep.subr.bf16.mxu0 0
    %429 = vmatpush2.bf16.xpose.msra.mxu0 0
    %430 = vmatprep.subr.bf16.mxu0 0
    %431 = vmatpush2.bf16.xpose.msra.mxu0 0
    %432 = vmatprep.subr.bf16.mxu0 0
    %433 = vmatpush2.bf16.xpose.msra.mxu0 0
    %434 = vmatprep.subr.bf16.mxu0 0
    %435 = vmatpush2.bf16.xpose.msra.mxu0 0
    %436 = vmatprep.subr.bf16.mxu0 0
    %437 = vmatpush2.bf16.xpose.msra.mxu0 0
    %438 = vmatprep.mubr.bf16.mxu0 0
    %439 = vmatmul.mubr.bf16.gmra.mxu0 %v401
    %v440 = vpop.f32.mrf.mxu0
    %v441 = vadd.f32 0.0, %v440
    %v442 = vpop.f32.mrf.mxu0
    %v443 = vpop.f32.mrf.mxu0
    %v444 = vpop.f32.mrf.mxu0
    %445 = vdwg.mxu0
    %v446 = vmul.f32 %v395, 0.125
    %v447 = vmul.f32 %v441, 0.125
    %vm448 = vcmask 130048
    %v449 = vsel %vm448, %v446, -inf
    %450 = vmax.xlane.f32.xlu0 %v449
    %v451 = vpop.xlane.xlu0 %450
    %v452 = vsel %vm448, %v447, -inf
    %453 = vmax.xlane.f32.xlu0 %v452
    %v454 = vpop.xlane.xlu0 %453
    %v455 = vsub.f32 %v446, %v451
    %v456 = vsub.f32 %v447, %v454
    %v457 = vmul.f32 %v455, 1.442695
    %v458 = vpow.pop %v457
    %v459 = vmul.f32 %v456, 1.442695
    %v460 = vpow.pop %v459
    %v461 = vsel %vm448, %v458, 0.0
    %462 = vadd.xlane.f32.xlu0 %v461
    %v463 = vpop.xlane.xlu0 %462
    %v464 = vsel %vm448, %v460, 0.0
    %465 = vadd.xlane.f32.xlu0 %v464
    %v466 = vpop.xlane.xlu0 %465
    %v467 = vrcp.pop %v463
    %v468 = vrcp.pop %v466
    %v469 = vmul.f32 %v458, %v467
    %v470 = vmul.f32 %v460, %v468
    %v471 = vpack.c.bf16 %v469, %v469
    %v472 = vpack.c.bf16 %v470, %v470
    %v474 = vsel %vm448, %v471, 0
    %476 = vmatprep.subr.bf16.mxu0 0
    %477 = vmatpush1.bf16.msra.mxu0 0
    %478 = vmatprep.subr.bf16.mxu0 0
    %479 = vmatpush1.bf16.msra.mxu0 0
    %480 = vmatprep.subr.bf16.mxu0 0
    %481 = vmatpush1.bf16.msra.mxu0 0
    %482 = vmatprep.subr.bf16.mxu0 0
    %483 = vmatpush1.bf16.msra.mxu0 0
    %484 = vmatprep.subr.bf16.mxu0 0
    %485 = vmatpush1.bf16.msra.mxu0 0
    %486 = vmatprep.subr.bf16.mxu0 0
    %487 = vmatpush1.bf16.msra.mxu0 0
    %488 = vmatprep.subr.bf16.mxu0 0
    %489 = vmatpush1.bf16.msra.mxu0 0
    %490 = vmatprep.subr.bf16.mxu0 0
    %491 = vmatpush1.bf16.msra.mxu0 %v351
    %492 = vmatprep.subr.bf16.mxu0 0
    %493 = vmatpush2.bf16.msra.mxu0 0
    %494 = vmatprep.subr.bf16.mxu0 0
    %495 = vmatpush2.bf16.msra.mxu0 0
    %496 = vmatprep.subr.bf16.mxu0 0
    %497 = vmatpush2.bf16.msra.mxu0 0
    %498 = vmatprep.subr.bf16.mxu0 0
    %499 = vmatpush2.bf16.msra.mxu0 0
    %500 = vmatprep.subr.bf16.mxu0 0
    %501 = vmatpush2.bf16.msra.mxu0 0
    %502 = vmatprep.subr.bf16.mxu0 0
    %503 = vmatpush2.bf16.msra.mxu0 0
    %504 = vmatprep.subr.bf16.mxu0 0
    %505 = vmatpush2.bf16.msra.mxu0 0
    %506 = vmatprep.subr.bf16.mxu0 0
    %507 = vmatpush2.bf16.msra.mxu0 0
    %508 = vmatprep.mubr.bf16.mxu0 0
    %509 = vmatmul.mubr.bf16.gmra.mxu0 %v474
    %v510 = vpop.f32.mrf.mxu0
    %v511 = vadd.f32 0.0, %v510
    %v512 = vpop.f32.mrf.mxu0
    %v513 = vpop.f32.mrf.mxu0
    %v514 = vpop.f32.mrf.mxu0
    %515 = vdwg.mxu0
    %v517 = vsel %vm448, %v472, 0
    %519 = vmatprep.subr.bf16.mxu0 0
    %520 = vmatpush1.bf16.msra.mxu0 0
    %521 = vmatprep.subr.bf16.mxu0 0
    %522 = vmatpush1.bf16.msra.mxu0 0
    %523 = vmatprep.subr.bf16.mxu0 0
    %524 = vmatpush1.bf16.msra.mxu0 0
    %525 = vmatprep.subr.bf16.mxu0 0
    %526 = vmatpush1.bf16.msra.mxu0 0
    %527 = vmatprep.subr.bf16.mxu0 0
    %528 = vmatpush1.bf16.msra.mxu0 0
    %529 = vmatprep.subr.bf16.mxu0 0
    %530 = vmatpush1.bf16.msra.mxu0 0
    %531 = vmatprep.subr.bf16.mxu0 0
    %532 = vmatpush1.bf16.msra.mxu0 0
    %533 = vmatprep.subr.bf16.mxu0 0
    %534 = vmatpush1.bf16.msra.mxu0 %v352
    %535 = vmatprep.subr.bf16.mxu0 0
    %536 = vmatpush2.bf16.msra.mxu0 0
    %537 = vmatprep.subr.bf16.mxu0 0
    %538 = vmatpush2.bf16.msra.mxu0 0
    %539 = vmatprep.subr.bf16.mxu0 0
    %540 = vmatpush2.bf16.msra.mxu0 0
    %541 = vmatprep.subr.bf16.mxu0 0
    %542 = vmatpush2.bf16.msra.mxu0 0
    %543 = vmatprep.subr.bf16.mxu0 0
    %544 = vmatpush2.bf16.msra.mxu0 0
    %545 = vmatprep.subr.bf16.mxu0 0
    %546 = vmatpush2.bf16.msra.mxu0 0
    %547 = vmatprep.subr.bf16.mxu0 0
    %548 = vmatpush2.bf16.msra.mxu0 0
    %549 = vmatprep.subr.bf16.mxu0 0
    %550 = vmatpush2.bf16.msra.mxu0 0
    %551 = vmatprep.mubr.bf16.mxu0 0
    %552 = vmatmul.mubr.bf16.gmra.mxu0 %v517
    %v553 = vpop.f32.mrf.mxu0
    %v554 = vadd.f32 0.0, %v553
    %v555 = vpop.f32.mrf.mxu0
    %v556 = vpop.f32.mrf.mxu0
    %v557 = vpop.f32.mrf.mxu0
    %558 = vdwg.mxu0
    %v559 = vpack.c.bf16 %v511, %v511
    %v560 = vpack.c.bf16 %v554, %v554
    %562 = vrot.lane.b32.xlu0 %v349, 64
    %v563 = vpop.permute.xlu0 %562
    %565 = vrot.lane.b32.xlu0 %v351, 64
    %v566 = vpop.permute.xlu0 %565
    %v568 = vsel %vm353, %v563, 0
    %v571 = vsel %vm353, %v566, 0
    %573 = vmatprep.subr.bf16.mxu0 0
    %574 = vmatpush1.bf16.xpose.msra.mxu0 0
    %575 = vmatprep.subr.bf16.mxu0 0
    %576 = vmatpush1.bf16.xpose.msra.mxu0 0
    %577 = vmatprep.subr.bf16.mxu0 0
    %578 = vmatpush1.bf16.xpose.msra.mxu0 0
    %579 = vmatprep.subr.bf16.mxu0 0
    %580 = vmatpush1.bf16.xpose.msra.mxu0 0
    %581 = vmatprep.subr.bf16.mxu0 0
    %582 = vmatpush1.bf16.xpose.msra.mxu0 0
    %583 = vmatprep.subr.bf16.mxu0 0
    %584 = vmatpush1.bf16.xpose.msra.mxu0 0
    %585 = vmatprep.subr.bf16.mxu0 0
    %586 = vmatpush1.bf16.xpose.msra.mxu0 0
    %587 = vmatprep.subr.bf16.mxu0 0
    %588 = vmatpush1.bf16.xpose.msra.mxu0 %v571
    %589 = vmatprep.subr.bf16.mxu0 0
    %590 = vmatpush2.bf16.xpose.msra.mxu0 0
    %591 = vmatprep.subr.bf16.mxu0 0
    %592 = vmatpush2.bf16.xpose.msra.mxu0 0
    %593 = vmatprep.subr.bf16.mxu0 0
    %594 = vmatpush2.bf16.xpose.msra.mxu0 0
    %595 = vmatprep.subr.bf16.mxu0 0
    %596 = vmatpush2.bf16.xpose.msra.mxu0 0
    %597 = vmatprep.subr.bf16.mxu0 0
    %598 = vmatpush2.bf16.xpose.msra.mxu0 0
    %599 = vmatprep.subr.bf16.mxu0 0
    %600 = vmatpush2.bf16.xpose.msra.mxu0 0
    %601 = vmatprep.subr.bf16.mxu0 0
    %602 = vmatpush2.bf16.xpose.msra.mxu0 0
    %603 = vmatprep.subr.bf16.mxu0 0
    %604 = vmatpush2.bf16.xpose.msra.mxu0 0
    %605 = vmatprep.mubr.bf16.mxu0 0
    %606 = vmatmul.mubr.bf16.gmra.mxu0 %v568
    %v607 = vpop.f32.mrf.mxu0
    %v608 = vadd.f32 0.0, %v607
    %v609 = vpop.f32.mrf.mxu0
    %v610 = vpop.f32.mrf.mxu0
    %v611 = vpop.f32.mrf.mxu0
    %612 = vdwg.mxu0
    %614 = vrot.lane.b32.xlu0 %v350, 64
    %v615 = vpop.permute.xlu0 %614
    %617 = vrot.lane.b32.xlu0 %v352, 64
    %v618 = vpop.permute.xlu0 %617
    %v620 = vsel %vm353, %v615, 0
    %v623 = vsel %vm353, %v618, 0
    %625 = vmatprep.subr.bf16.mxu0 0
    %626 = vmatpush1.bf16.xpose.msra.mxu0 0
    %627 = vmatprep.subr.bf16.mxu0 0
    %628 = vmatpush1.bf16.xpose.msra.mxu0 0
    %629 = vmatprep.subr.bf16.mxu0 0
    %630 = vmatpush1.bf16.xpose.msra.mxu0 0
    %631 = vmatprep.subr.bf16.mxu0 0
    %632 = vmatpush1.bf16.xpose.msra.mxu0 0
    %633 = vmatprep.subr.bf16.mxu0 0
    %634 = vmatpush1.bf16.xpose.msra.mxu0 0
    %635 = vmatprep.subr.bf16.mxu0 0
    %636 = vmatpush1.bf16.xpose.msra.mxu0 0
    %637 = vmatprep.subr.bf16.mxu0 0
    %638 = vmatpush1.bf16.xpose.msra.mxu0 0
    %639 = vmatprep.subr.bf16.mxu0 0
    %640 = vmatpush1.bf16.xpose.msra.mxu0 %v623
    %641 = vmatprep.subr.bf16.mxu0 0
    %642 = vmatpush2.bf16.xpose.msra.mxu0 0
    %643 = vmatprep.subr.bf16.mxu0 0
    %644 = vmatpush2.bf16.xpose.msra.mxu0 0
    %645 = vmatprep.subr.bf16.mxu0 0
    %646 = vmatpush2.bf16.xpose.msra.mxu0 0
    %647 = vmatprep.subr.bf16.mxu0 0
    %648 = vmatpush2.bf16.xpose.msra.mxu0 0
    %649 = vmatprep.subr.bf16.mxu0 0
    %650 = vmatpush2.bf16.xpose.msra.mxu0 0
    %651 = vmatprep.subr.bf16.mxu0 0
    %652 = vmatpush2.bf16.xpose.msra.mxu0 0
    %653 = vmatprep.subr.bf16.mxu0 0
    %654 = vmatpush2.bf16.xpose.msra.mxu0 0
    %655 = vmatprep.subr.bf16.mxu0 0
    %656 = vmatpush2.bf16.xpose.msra.mxu0 0
    %657 = vmatprep.mubr.bf16.mxu0 0
    %658 = vmatmul.mubr.bf16.gmra.mxu0 %v620
    %v659 = vpop.f32.mrf.mxu0
    %v660 = vadd.f32 0.0, %v659
    %v661 = vpop.f32.mrf.mxu0
    %v662 = vpop.f32.mrf.mxu0
    %v663 = vpop.f32.mrf.mxu0
    %664 = vdwg.mxu0
    %v665 = vmul.f32 %v608, 0.125
    %v666 = vmul.f32 %v660, 0.125
    %v667 = vsel %vm448, %v665, -inf
    %668 = vmax.xlane.f32.xlu0 %v667
    %v669 = vpop.xlane.xlu0 %668
    %v670 = vsel %vm448, %v666, -inf
    %671 = vmax.xlane.f32.xlu0 %v670
    %v672 = vpop.xlane.xlu0 %671
    %v673 = vsub.f32 %v665, %v669
    %v674 = vsub.f32 %v666, %v672
    %v675 = vmul.f32 %v673, 1.442695
    %v676 = vpow.pop %v675
    %v677 = vmul.f32 %v674, 1.442695
    %v678 = vpow.pop %v677
    %v679 = vsel %vm448, %v676, 0.0
    %680 = vadd.xlane.f32.xlu0 %v679
    %v681 = vpop.xlane.xlu0 %680
    %v682 = vsel %vm448, %v678, 0.0
    %683 = vadd.xlane.f32.xlu0 %v682
    %v684 = vpop.xlane.xlu0 %683
    %v685 = vrcp.pop %v681
    %v686 = vrcp.pop %v684
    %v687 = vmul.f32 %v676, %v685
    %v688 = vmul.f32 %v678, %v686
    %v689 = vpack.c.bf16 %v687, %v687
    %v690 = vpack.c.bf16 %v688, %v688
    %v693 = vsel %vm448, %v689, 0
    %695 = vmatprep.subr.bf16.mxu0 0
    %696 = vmatpush1.bf16.msra.mxu0 0
    %697 = vmatprep.subr.bf16.mxu0 0
    %698 = vmatpush1.bf16.msra.mxu0 0
    %699 = vmatprep.subr.bf16.mxu0 0
    %700 = vmatpush1.bf16.msra.mxu0 0
    %701 = vmatprep.subr.bf16.mxu0 0
    %702 = vmatpush1.bf16.msra.mxu0 0
    %703 = vmatprep.subr.bf16.mxu0 0
    %704 = vmatpush1.bf16.msra.mxu0 0
    %705 = vmatprep.subr.bf16.mxu0 0
    %706 = vmatpush1.bf16.msra.mxu0 0
    %707 = vmatprep.subr.bf16.mxu0 0
    %708 = vmatpush1.bf16.msra.mxu0 0
    %709 = vmatprep.subr.bf16.mxu0 0
    %710 = vmatpush1.bf16.msra.mxu0 %v566
    %711 = vmatprep.subr.bf16.mxu0 0
    %712 = vmatpush2.bf16.msra.mxu0 0
    %713 = vmatprep.subr.bf16.mxu0 0
    %714 = vmatpush2.bf16.msra.mxu0 0
    %715 = vmatprep.subr.bf16.mxu0 0
    %716 = vmatpush2.bf16.msra.mxu0 0
    %717 = vmatprep.subr.bf16.mxu0 0
    %718 = vmatpush2.bf16.msra.mxu0 0
    %719 = vmatprep.subr.bf16.mxu0 0
    %720 = vmatpush2.bf16.msra.mxu0 0
    %721 = vmatprep.subr.bf16.mxu0 0
    %722 = vmatpush2.bf16.msra.mxu0 0
    %723 = vmatprep.subr.bf16.mxu0 0
    %724 = vmatpush2.bf16.msra.mxu0 0
    %725 = vmatprep.subr.bf16.mxu0 0
    %726 = vmatpush2.bf16.msra.mxu0 0
    %727 = vmatprep.mubr.bf16.mxu0 0
    %728 = vmatmul.mubr.bf16.gmra.mxu0 %v693
    %v729 = vpop.f32.mrf.mxu0
    %v730 = vadd.f32 0.0, %v729
    %v731 = vpop.f32.mrf.mxu0
    %v732 = vpop.f32.mrf.mxu0
    %v733 = vpop.f32.mrf.mxu0
    %734 = vdwg.mxu0
    %v737 = vsel %vm448, %v690, 0
    %739 = vmatprep.subr.bf16.mxu0 0
    %740 = vmatpush1.bf16.msra.mxu0 0
    %741 = vmatprep.subr.bf16.mxu0 0
    %742 = vmatpush1.bf16.msra.mxu0 0
    %743 = vmatprep.subr.bf16.mxu0 0
    %744 = vmatpush1.bf16.msra.mxu0 0
    %745 = vmatprep.subr.bf16.mxu0 0
    %746 = vmatpush1.bf16.msra.mxu0 0
    %747 = vmatprep.subr.bf16.mxu0 0
    %748 = vmatpush1.bf16.msra.mxu0 0
    %749 = vmatprep.subr.bf16.mxu0 0
    %750 = vmatpush1.bf16.msra.mxu0 0
    %751 = vmatprep.subr.bf16.mxu0 0
    %752 = vmatpush1.bf16.msra.mxu0 0
    %753 = vmatprep.subr.bf16.mxu0 0
    %754 = vmatpush1.bf16.msra.mxu0 %v618
    %755 = vmatprep.subr.bf16.mxu0 0
    %756 = vmatpush2.bf16.msra.mxu0 0
    %757 = vmatprep.subr.bf16.mxu0 0
    %758 = vmatpush2.bf16.msra.mxu0 0
    %759 = vmatprep.subr.bf16.mxu0 0
    %760 = vmatpush2.bf16.msra.mxu0 0
    %761 = vmatprep.subr.bf16.mxu0 0
    %762 = vmatpush2.bf16.msra.mxu0 0
    %763 = vmatprep.subr.bf16.mxu0 0
    %764 = vmatpush2.bf16.msra.mxu0 0
    %765 = vmatprep.subr.bf16.mxu0 0
    %766 = vmatpush2.bf16.msra.mxu0 0
    %767 = vmatprep.subr.bf16.mxu0 0
    %768 = vmatpush2.bf16.msra.mxu0 0
    %769 = vmatprep.subr.bf16.mxu0 0
    %770 = vmatpush2.bf16.msra.mxu0 0
    %771 = vmatprep.mubr.bf16.mxu0 0
    %772 = vmatmul.mubr.bf16.gmra.mxu0 %v737
    %v773 = vpop.f32.mrf.mxu0
    %v774 = vadd.f32 0.0, %v773
    %v775 = vpop.f32.mrf.mxu0
    %v776 = vpop.f32.mrf.mxu0
    %v777 = vpop.f32.mrf.mxu0
    %778 = vdwg.mxu0
    %v779 = vpack.c.bf16 %v730, %v730
    %v780 = vpack.c.bf16 %v774, %v774
    %v783 = vunpack.c.l.b16 %v779
    %v784 = vunpack.c.l.b16 %v780
    %v785 = vpack.c.b16 %v784, %v783
    %v802 = vunpack.c.l.b16 %v135
    %v803 = vunpack.c.l.b16 %v136
    %v804 = vunpack.c.l.b16 %v137
    %v805 = vunpack.c.l.b16 %v138
    %v806 = vunpack.c.l.b16 %v139
    %v807 = vunpack.c.l.b16 %v140
    %v808 = vunpack.c.l.b16 %v141
    %v809 = vunpack.c.l.b16 %v142
    %v810 = vunpack.c.l.b16 %v143
    %v811 = vunpack.c.l.b16 %v144
    %v812 = vunpack.c.l.b16 %v145
    %v813 = vunpack.c.l.b16 %v146
    %v814 = vunpack.c.l.b16 %v147
    %v815 = vunpack.c.l.b16 %v148
    %v816 = vunpack.c.l.b16 %v149
    %v817 = vunpack.c.l.b16 %v150
    %v818 = vpack.c.b16 %v803, %v802
    %v819 = vpack.c.b16 %v805, %v804
    %v820 = vpack.c.b16 %v807, %v806
    %v821 = vpack.c.b16 %v809, %v808
    %v822 = vpack.c.b16 %v811, %v810
    %v823 = vpack.c.b16 %v813, %v812
    %v824 = vpack.c.b16 %v815, %v814
    %v825 = vpack.c.b16 %v817, %v816
    %826 = vrot.lane.b32.xlu0 %v818, 64
    %v827 = vpop.permute.xlu0 %826
    %828 = vrot.lane.b32.xlu0 %v819, 64
    %v829 = vpop.permute.xlu0 %828
    %830 = vrot.lane.b32.xlu0 %v820, 64
    %v831 = vpop.permute.xlu0 %830
    %832 = vrot.lane.b32.xlu0 %v821, 64
    %v833 = vpop.permute.xlu0 %832
    %834 = vrot.lane.b32.xlu0 %v822, 64
    %v835 = vpop.permute.xlu0 %834
    %836 = vrot.lane.b32.xlu0 %v823, 64
    %v837 = vpop.permute.xlu0 %836
    %838 = vrot.lane.b32.xlu0 %v824, 64
    %v839 = vpop.permute.xlu0 %838
    %840 = vrot.lane.b32.xlu0 %v825, 64
    %v841 = vpop.permute.xlu0 %840
    %v843 = vsel %vm353, %v785, 0
    %v846 = vsel %vm353, %v827, 0
    %v849 = vsel %vm353, %v829, 0
    %v852 = vsel %vm353, %v831, 0
    %v855 = vsel %vm353, %v833, 0
    %v858 = vsel %vm353, %v835, 0
    %v861 = vsel %vm353, %v837, 0
    %v864 = vsel %vm353, %v839, 0
    %v867 = vsel %vm353, %v841, 0
    %869 = vmatprep.subr.bf16.mxu0 0
    %870 = vmatpush1.bf16.xpose.msra.mxu0 %v867
    %871 = vmatprep.subr.bf16.mxu0 0
    %872 = vmatpush1.bf16.xpose.msra.mxu0 %v864
    %873 = vmatprep.subr.bf16.mxu0 0
    %874 = vmatpush1.bf16.xpose.msra.mxu0 %v861
    %875 = vmatprep.subr.bf16.mxu0 0
    %876 = vmatpush1.bf16.xpose.msra.mxu0 %v858
    %877 = vmatprep.subr.bf16.mxu0 0
    %878 = vmatpush1.bf16.xpose.msra.mxu0 %v855
    %879 = vmatprep.subr.bf16.mxu0 0
    %880 = vmatpush1.bf16.xpose.msra.mxu0 %v852
    %881 = vmatprep.subr.bf16.mxu0 0
    %882 = vmatpush1.bf16.xpose.msra.mxu0 %v849
    %883 = vmatprep.subr.bf16.mxu0 0
    %884 = vmatpush1.bf16.xpose.msra.mxu0 %v846
    %885 = vmatprep.subr.bf16.mxu0 0
    %886 = vmatpush2.bf16.xpose.msra.mxu0 0
    %887 = vmatprep.subr.bf16.mxu0 0
    %888 = vmatpush2.bf16.xpose.msra.mxu0 0
    %889 = vmatprep.subr.bf16.mxu0 0
    %890 = vmatpush2.bf16.xpose.msra.mxu0 0
    %891 = vmatprep.subr.bf16.mxu0 0
    %892 = vmatpush2.bf16.xpose.msra.mxu0 0
    %893 = vmatprep.subr.bf16.mxu0 0
    %894 = vmatpush2.bf16.xpose.msra.mxu0 0
    %895 = vmatprep.subr.bf16.mxu0 0
    %896 = vmatpush2.bf16.xpose.msra.mxu0 0
    %897 = vmatprep.subr.bf16.mxu0 0
    %898 = vmatpush2.bf16.xpose.msra.mxu0 0
    %899 = vmatprep.subr.bf16.mxu0 0
    %900 = vmatpush2.bf16.xpose.msra.mxu0 0
    %901 = vmatprep.mubr.bf16.mxu0 0
    %902 = vmatmul.mubr.bf16.gmra.mxu0 %v843
    %v903 = vpop.f32.mrf.mxu0
    %v904 = vadd.f32 0.0, %v903
    %v905 = vpop.f32.mrf.mxu0
    %v906 = vpop.f32.mrf.mxu0
    %v907 = vadd.f32 0.0, %v906
    %v908 = vpop.f32.mrf.mxu0
    %909 = vdwg.mxu0
    %v912 = vunpack.c.l.b16 %v559
    %v913 = vunpack.c.l.b16 %v560
    %v914 = vpack.c.b16 %v913, %v912
    %v916 = vsel %vm353, %v914, 0
    %v919 = vsel %vm353, %v818, 0
    %v922 = vsel %vm353, %v819, 0
    %v925 = vsel %vm353, %v820, 0
    %v928 = vsel %vm353, %v821, 0
    %v931 = vsel %vm353, %v822, 0
    %v934 = vsel %vm353, %v823, 0
    %v937 = vsel %vm353, %v824, 0
    %v940 = vsel %vm353, %v825, 0
    %942 = vmatprep.subr.bf16.mxu0 0
    %943 = vmatpush1.bf16.xpose.msra.mxu0 %v940
    %944 = vmatprep.subr.bf16.mxu0 0
    %945 = vmatpush1.bf16.xpose.msra.mxu0 %v937
    %946 = vmatprep.subr.bf16.mxu0 0
    %947 = vmatpush1.bf16.xpose.msra.mxu0 %v934
    %948 = vmatprep.subr.bf16.mxu0 0
    %949 = vmatpush1.bf16.xpose.msra.mxu0 %v931
    %950 = vmatprep.subr.bf16.mxu0 0
    %951 = vmatpush1.bf16.xpose.msra.mxu0 %v928
    %952 = vmatprep.subr.bf16.mxu0 0
    %953 = vmatpush1.bf16.xpose.msra.mxu0 %v925
    %954 = vmatprep.subr.bf16.mxu0 0
    %955 = vmatpush1.bf16.xpose.msra.mxu0 %v922
    %956 = vmatprep.subr.bf16.mxu0 0
    %957 = vmatpush1.bf16.xpose.msra.mxu0 %v919
    %958 = vmatprep.subr.bf16.mxu0 0
    %959 = vmatpush2.bf16.xpose.msra.mxu0 0
    %960 = vmatprep.subr.bf16.mxu0 0
    %961 = vmatpush2.bf16.xpose.msra.mxu0 0
    %962 = vmatprep.subr.bf16.mxu0 0
    %963 = vmatpush2.bf16.xpose.msra.mxu0 0
    %964 = vmatprep.subr.bf16.mxu0 0
    %965 = vmatpush2.bf16.xpose.msra.mxu0 0
    %966 = vmatprep.subr.bf16.mxu0 0
    %967 = vmatpush2.bf16.xpose.msra.mxu0 0
    %968 = vmatprep.subr.bf16.mxu0 0
    %969 = vmatpush2.bf16.xpose.msra.mxu0 0
    %970 = vmatprep.subr.bf16.mxu0 0
    %971 = vmatpush2.bf16.xpose.msra.mxu0 0
    %972 = vmatprep.subr.bf16.mxu0 0
    %973 = vmatpush2.bf16.xpose.msra.mxu0 0
    %974 = vmatprep.mubr.bf16.mxu0 0
    %975 = vmatmul.mubr.bf16.gmra.mxu0 %v916
    %v976 = vpop.f32.mrf.mxu0
    %v977 = vadd.f32 %v904, %v976
    %v978 = vpop.f32.mrf.mxu0
    %v979 = vpop.f32.mrf.mxu0
    %v980 = vadd.f32 %v907, %v979
    %v981 = vpop.f32.mrf.mxu0
    %982 = vdwg.mxu0
    %v983 = vadd.f32 %v96, %v977
    %v984 = vadd.f32 %v97, %v980
    %985 = vadd.xlane.f32.xlu0 %v983
    %v986 = vpop.xlane.xlu0 %985
    %987 = vadd.xlane.f32.xlu0 %v984
    %v988 = vpop.xlane.xlu0 %987
    %v989 = vrcp.pop 128.0
    %v990 = vmul.f32 %v986, %v989
    %v991 = vmul.f32 %v988, %v989
    %v992 = vsub.f32 %v983, %v990
    %v993 = vsub.f32 %v984, %v991
    %v994 = vmul.f32 %v992, %v992
    %v995 = vmul.f32 %v993, %v993
    %996 = vadd.xlane.f32.xlu0 %v994
    %v997 = vpop.xlane.xlu0 %996
    %998 = vadd.xlane.f32.xlu0 %v995
    %v999 = vpop.xlane.xlu0 %998
    %v1000 = vrcp.pop 127.0
    %v1001 = vmul.f32 %v997, %v1000
    %v1002 = vmul.f32 %v999, %v1000
    %v1003 = vrsqrt.pop %v1001
    %v1004 = vmul.f32 %v1001, %v1003
    %vm1005 = vcmp.eq.f32.partialorder %v1001, inf
    %v1006 = vsel %vm1005, %v1001, %v1004
    %vm1007 = vcmp.eq.f32.partialorder %v1001, 0.0
    %v1008 = vand.u32 %v1001, 2147483648
    %v1009 = vsel %vm1007, %v1008, %v1006
    %v1010 = vrsqrt.pop %v1002
    %v1011 = vmul.f32 %v1002, %v1010
    %vm1012 = vcmp.eq.f32.partialorder %v1002, inf
    %v1013 = vsel %vm1012, %v1002, %v1011
    %vm1014 = vcmp.eq.f32.partialorder %v1002, 0.0
    %v1015 = vand.u32 %v1002, 2147483648
    %v1016 = vsel %vm1014, %v1015, %v1013
    %v1017 = vld [vmem:[%s5] sm:$0x1]
    %v1019 = vlaneseq
    %v1020 = vshrl.u32 %v1019, 7
    %v1021 = vsub.s32 0, %v1020
    %v1022 = vrot.slane %v1017, %v1021
    %v1024 = vmul.f32 %v1022, %v992
    %v1025 = vmul.f32 %v1022, %v993
    %v1026 = vadd.f32 %v1009, 1e-06
    %v1027 = vadd.f32 %v1016, 1e-06
    %v1028 = vrcp.pop %v1026
    %v1029 = vrcp.pop %v1027
    %v1030 = vmul.f32 %v1024, %v1028
    %v1031 = vmul.f32 %v1025, %v1029
    %v1032 = vld [vmem:[%s6] sm:$0x1]
    %v1034 = vlaneseq
    %v1035 = vshrl.u32 %v1034, 7
    %v1036 = vsub.s32 0, %v1035
    %v1037 = vrot.slane %v1032, %v1036
    %v1039 = vadd.f32 %v1030, %v1037
    %v1040 = vadd.f32 %v1031, %v1037
    %1041 = vst [vmem:[#allocation11] sm:$0xff] %v1039
    %1042 = vst [vmem:[#allocation11 + $0x8] sm:$0xff] %v1040
    // Predicated region
    $region50: #{tpu_custom_call.1} parent=1 // pred_check
      _
    $region51: #{tpu_custom_call.1} parent=1 // pred_check_branch
      %1044 = sbr.rel (0) target = $region53
    $region52: #{tpu_custom_call.1} parent=1 // pred_region
      %s1046 = ssub.s32 256, 256
      %1047 = vsyncadd [#allocation4], %s1046
      %s1048 = sshll.u32 [#allocation11], 4
      %s1049 = int_to_ptr.vmem [resolvable:$true] %s1048
      %1054 = dma.vmem_to_hbm [thread:$0]  %s1049, 256, %s7, [#allocation4], 128, 128, 8
    $region53: #{tpu_custom_call.1} parent=1 // pred_fallthru
      _
    // Predicated region
    $region54: #{tpu_custom_call.1} parent=1 // pred_check
      _
    $region55: #{tpu_custom_call.1} parent=1 // pred_check_branch
      %1056 = sbr.rel (0) target = $region57
    $region56: #{tpu_custom_call.1} parent=1 // pred_region
      %1057 = dma.done [#allocation4], 256
    $region57: #{tpu_custom_call.1} parent=1 // pred_fallthru
      _
    %1058 = vsyncpa [#allocation3], 1
    %1059 = vsyncpa [#allocation6], 1
    %1060 = vsyncpa [#allocation9], 1
    %1061 = vsyncpa [#allocation4], 1

</llo_original>
